<compile_context>
chip_gen: v5e
topology: v5e:2x2
jax: 0.10.0
libtpu: 0.0.40
codegen_flags: <defaults>
</compile_context>

<pallas_src>
import math
from functools import partial

import numpy as np
import jax
import jax.numpy as jnp
from jax.experimental import pallas as pl
from jax.experimental.pallas import tpu as pltpu

VMEM = pltpu.MemorySpace.VMEM
_SQRT_HALF = 0.7071067811865476
_TWO_PI = 2.0 * math.pi


# ----------------------------------------------------------------------------
# small in-kernel math helpers (pure jnp, VPU/EUP friendly)
# ----------------------------------------------------------------------------
def _erf(x):
    """erf via Abramowitz & Stegun 7.1.26 (|err| <= 1.5e-7); all-VPU/EUP ops."""
    a1, a2, a3, a4, a5 = (0.254829592, -0.284496736, 1.421413741,
                          -1.453152027, 1.061405429)
    p = 0.3275911
    sgn = jnp.where(x < 0.0, -1.0, 1.0)
    ax = jnp.abs(x)
    t = 1.0 / (1.0 + p * ax)
    poly = t * (a1 + t * (a2 + t * (a3 + t * (a4 + t * a5))))
    return sgn * (1.0 - poly * jnp.exp(-ax * ax))


def _gelu(x):
    """Exact (erf) GELU, matching torch.nn.GELU default."""
    return 0.5 * x * (1.0 + _erf(x * _SQRT_HALF))


def _ln_from_avg(h, avg, gamma, beta, eps):
    """Channel LayerNorm in channels-on-sublanes layout.

    h:     (C, S) activations (f32)
    avg:   (C, C) averaging matrix (block-diagonal 1/group_size) -- computes and
           broadcasts the per-group channel mean in one matmul (no sublane
           slicing / concatenation needed).
    gamma, beta: (C, 1)
    """
    mu = jnp.dot(avg, h, preferred_element_type=jnp.float32)
    d = h - mu
    var = jnp.dot(avg, d * d, preferred_element_type=jnp.float32)
    return d * jax.lax.rsqrt(var + eps) * gamma + beta


# ----------------------------------------------------------------------------
# Pallas kernels
# ----------------------------------------------------------------------------
def _mask_embed_kernel(eps,
                       x_ref,                          # (16, ts) bf16
                       w1_ref, p1_ref, avg1_ref,       # stage 1
                       w2_ref, p2_ref, avg2_ref,       # stage 2
                       w3_ref, b3_ref,                 # stage 3
                       o_ref):                         # (1, hidden, ts)
    """Fused MaskEmbedding: conv2x2s2 -> LN -> GELU -> conv2x2s2 -> LN -> GELU -> 1x1 conv.

    Activations are (channels, spatial_tile): channels on sublanes, spatial on
    lanes (batch folded into the lane axis by the wrapper).  conv1 is
    pre-folded into a (4*c1, 16) contraction over the flattened 4x4 patch so
    its output rows are already in the (kh, kw, c) order conv2 expects.
    p*_ref pack (bias, gamma, beta) columns for each stage.
    """
    x = x_ref[...]                                                     # bf16
    h1 = jnp.dot(w1_ref[...], x, preferred_element_type=jnp.float32) + p1_ref[:, 0:1]
    a1 = _gelu(_ln_from_avg(h1, avg1_ref[...], p1_ref[:, 1:2], p1_ref[:, 2:3], eps))

    h2 = jnp.dot(w2_ref[...], a1.astype(jnp.bfloat16),
                 preferred_element_type=jnp.float32) + p2_ref[:, 0:1]
    a2 = _gelu(_ln_from_avg(h2, avg2_ref[...], p2_ref[:, 1:2], p2_ref[:, 2:3], eps))

    y = jnp.dot(w3_ref[...], a2.astype(jnp.bfloat16),
                preferred_element_type=jnp.float32) + b3_ref[...]
    o_ref[0] = y.astype(o_ref.dtype)


def _sparse_embed_kernel(bs, n_coord, n_text, inv_w, inv_h, *refs):
    """Fused sparse-prompt embedding (box corners + points + text tokens).

    Writes directly into the concatenated (bs, n_tokens, hidden) slab:
      tokens [0, n_coord)        : Fourier PE + type-conditioned learned embeds
      tokens [n_coord, n_tokens) : 2-layer text MLP
    All coordinate-branch math is batched 3-D -> one full-width store.
    """
    i = 0
    if n_coord > 0:
        coords_ref, types_ref, pe_ref, emb_ref = refs[i:i + 4]
        i += 4
    if n_text > 0:
        tx_ref, tw1_ref, tb1_ref, tw2_ref, tb2_ref = refs[i:i + 5]
        i += 5
    o_ref = refs[i]

    if n_coord > 0:
        c = coords_ref[...]                                   # (bs, nc, 2)
        cx = 2.0 * ((c[:, :, 0:1] + 0.5) * inv_w) - 1.0       # x normalized by W
        cy = 2.0 * ((c[:, :, 1:2] + 0.5) * inv_h) - 1.0       # y normalized by H
        pe = pe_ref[...]                                      # (1, 2, half)
        proj = _TWO_PI * (cx * pe[:, 0:1, :] + cy * pe[:, 1:2, :])   # (bs, nc, half)

        t = types_ref[...]                                    # (bs, nc, 1)
        m_na = (t == -1.0).astype(jnp.float32)                # "not a point"
        keep = 1.0 - m_na
        emb = emb_ref[...]                                    # (1, 5, hidden)
        add = (m_na * emb[:, 0:1, :]
               + (t == 0.0).astype(jnp.float32) * emb[:, 1:2, :]
               + (t == 1.0).astype(jnp.float32) * emb[:, 2:3, :]
               + (t == 2.0).astype(jnp.float32) * emb[:, 3:4, :]
               + (t == 3.0).astype(jnp.float32) * emb[:, 4:5, :])    # (bs, nc, hidden)

        tok = jnp.concatenate([jnp.sin(proj), jnp.cos(proj)], axis=-1) * keep + add
        o_ref[:, :n_coord, :] = tok                           # single store

    if n_text > 0:
        # TODO(synk): TextEmbeddingMLP definition not provided; assumed
        #   Linear -> GELU -> Linear onto hidden_size.
        tx = tx_ref[...]                                      # (bs*nt, D) bf16
        h = jnp.dot(tx, tw1_ref[...], preferred_element_type=jnp.float32) + tb1_ref[...]
        h = _gelu(h)
        y = jnp.dot(h.astype(jnp.bfloat16), tw2_ref[...],
                    preferred_element_type=jnp.float32) + tb2_ref[...]
        for b in range(bs):                                   # bs full-width stores
            o_ref[b, n_coord:, :] = y[b * n_text:(b + 1) * n_text, :]


# ----------------------------------------------------------------------------
# helpers
# ----------------------------------------------------------------------------
def _pick_spatial_tile(S, bs, cap=8192):
    """Largest lane-dense divisor of S under `cap`; keep >=2 total grid steps
    (bs * S/ts) so both v7x TensorCores get work under 'parallel' semantics."""
    ts = S
    while ts > cap and ts % 2 == 0 and (ts // 2) % 128 == 0:
        ts //= 2
    if bs * (S // ts) < 2 and ts % 2 == 0 and (ts // 2) % 128 == 0:
        ts //= 2
    return ts


# ----------------------------------------------------------------------------
# SamPromptEncoder (JAX/Pallas)
# ----------------------------------------------------------------------------
class SamPromptEncoderPallas:
    def __init__(self, hidden_size=32, image_embedding_size=8,
                 mask_input_channels=16, input_image_size=128, text_dim=24,
                 dense_dtype=jnp.float32, key=jax.random.PRNGKey(1234)):
        self.hidden_size = hidden_size
        self.image_embedding_size = image_embedding_size
        if isinstance(input_image_size, (tuple, list)):
            self.input_hw = (float(input_image_size[0]), float(input_image_size[1]))
        else:
            self.input_hw = (float(input_image_size), float(input_image_size))
        # f32 default for parity with the torch module; pass jnp.bfloat16 on
        # v5e (or when the decoder is bf16) to halve the dense writeback.
        self.dense_dtype = dense_dtype

        half = hidden_size // 2
        c1 = mask_input_channels // 4          # conv1 out-channels
        c2 = mask_input_channels               # conv2 out-channels
        self.c1, self.c2 = c1, c2

        ks = list(jax.random.split(key, 16))
        nrm = lambda k, s, scale=0.02: scale * jax.random.normal(k, s, jnp.float32)

        # ---- SamPositionalEmbedding (shared by points / boxes) --------------
        pe = jax.random.normal(ks[0], (2, half), jnp.float32)
        self.pe3 = pe.reshape(1, 2, half)

        # ---- Point / Box learned embeddings: [not_a_point, e0, e1, e2, e3] --
        self.emb3 = nrm(ks[1], (5, hidden_size)).reshape(1, 5, hidden_size)

        # ---- MaskEmbedding ---------------------------------------------------
        # conv1: 1 -> c1, k=2, s=2.  Folded so one (4*c1, 16) matmul over the
        # flattened 4x4 patch computes conv1 for all 4 sub-patches, with output
        # row order (kh, kw, c) == the feature order conv2 expects.
        # TODO(synk): loading a real torch checkpoint needs the documented
        #   permute of conv2's (C_out, C_in, kH, kW) weights into this layout
        #   and a 4x tiling of conv1's bias / LN1 gamma,beta.
        w1 = np.asarray(0.1 * jax.random.normal(ks[2], (c1, 2, 2), jnp.float32))
        w1f = np.zeros((4 * c1, 16), np.float32)
        for a in range(2):
            for b in range(2):
                for dh in range(2):
                    for dw in range(2):
                        p = (2 * a + dh) * 4 + (2 * b + dw)
                        for c in range(c1):
                            w1f[(a * 2 + b) * c1 + c, p] = w1[c, dh, dw]
        self.w1f = jnp.asarray(w1f, jnp.bfloat16)
        # packed (bias, gamma, beta) for stage 1 (tiled per sub-patch group)
        self.p1 = jnp.stack([jnp.zeros((4 * c1,), jnp.float32),
                             jnp.ones((4 * c1,), jnp.float32),
                             jnp.zeros((4 * c1,), jnp.float32)], axis=1)
        avg1 = np.zeros((4 * c1, 4 * c1), np.float32)   # per-sub-patch channel mean
        for g in range(4):
            avg1[g * c1:(g + 1) * c1, g * c1:(g + 1) * c1] = 1.0 / c1
        self.avg1 = jnp.asarray(avg1, jnp.float32)

        # conv2: c1 -> c2, k=2, s=2  -> (c2, 4*c1) contraction
        self.w2t = jnp.asarray(
            0.1 * jax.random.normal(ks[3], (c2, 4 * c1), jnp.float32), jnp.bfloat16)
        self.p2 = jnp.stack([jnp.zeros((c2,), jnp.float32),
                             jnp.ones((c2,), jnp.float32),
                             jnp.zeros((c2,), jnp.float32)], axis=1)
        self.avg2 = jnp.full((c2, c2), 1.0 / c2, jnp.float32)

        # conv3: 1x1, c2 -> hidden
        self.w3t = jnp.asarray(
            0.1 * jax.random.normal(ks[4], (hidden_size, c2), jnp.float32), jnp.bfloat16)
        self.b3f = jnp.zeros((hidden_size, 1), jnp.float32)

        self.no_mask_embed = nrm(ks[5], (1, hidden_size))

        # ---- TextEmbeddingMLP (assumed Linear -> GELU -> Linear) -------------
        self.tw1 = jnp.asarray(0.1 * jax.random.normal(ks[6], (text_dim, hidden_size),
                                                       jnp.float32), jnp.bfloat16)
        self.tb1 = jnp.zeros((1, hidden_size), jnp.float32)
        self.tw2 = jnp.asarray(0.1 * jax.random.normal(ks[7], (hidden_size, hidden_size),
                                                       jnp.float32), jnp.bfloat16)
        self.tb2 = jnp.zeros((1, hidden_size), jnp.float32)

        # masked_img_embd parameter (only used by patch_img_embd, kept for parity)
        self.masked_img_embd = nrm(ks[8], (1, hidden_size, 1, 1))

    # --- mask branch ----------------------------------------------------------
    def _embed_mask(self, masks):
        """masks NCHW (bs, 1, H, W) -> dense NCHW (bs, hidden, H/4, W/4)."""
        bs, _, H, W = masks.shape
        h4, w4 = H // 4, W // 4
        S = h4 * w4
        hidden = self.hidden_size

        # Patchify the single-channel mask in bf16 with batch folded into the
        # lane axis: (16, bs*S), row = ph*4+pw pixel of the 4x4 patch,
        # col = b*S + flattened output spatial index.
        x = masks.astype(jnp.bfloat16).reshape(bs, h4, 4, w4, 4)
        xp = jnp.transpose(x, (2, 4, 0, 1, 3)).reshape(16, bs * S)
        # TODO(synk): the patchify could be pulled into the kernel with strided
        #   sublane loads to drop this (small, bf16) extra HBM pass entirely.

        prod = (S % 128 == 0)
        if prod:
            ts = _pick_spatial_tile(S, bs)
            nspb = S // ts
            n_tiles = bs * nspb
            out_shape = jax.ShapeDtypeStruct((bs, hidden, S), self.dense_dtype)
            out_spec = pl.BlockSpec((1, hidden, ts),
                                    lambda t: (t // nspb, 0, t % nspb))
        else:
            # tiny masks: one fully lane-dense block over the flat bs*S axis
            ts = bs * S
            n_tiles = 1
            out_shape = jax.ShapeDtypeStruct((1, hidden, bs * S), self.dense_dtype)
            out_spec = pl.BlockSpec((1, hidden, ts), lambda t: (0, 0, t))

        # VMEM limit from the actual footprint (double-buffered blocks + f32
        # working set), clamped to stay inside v7x's 64 MiB.
        obytes = jnp.dtype(self.dense_dtype).itemsize
        per_step = 2 * (16 * ts * 2 + hidden * ts * obytes)
        work = (8 * self.c1 + 2 * self.c2 + hidden) * ts * 4
        vmem_limit = int(min(64 << 20, max(16 << 20, per_step + work + (4 << 20))))

        wspec = lambda a: pl.BlockSpec(a.shape, lambda t: (0, 0))

        out = pl.pallas_call(
            partial(_mask_embed_kernel, 1e-6),
            out_shape=out_shape,
            grid=(n_tiles,),
            in_specs=[
                pl.BlockSpec((16, ts), lambda t: (0, t)),
                wspec(self.w1f), wspec(self.p1), wspec(self.avg1),
                wspec(self.w2t), wspec(self.p2), wspec(self.avg2),
                wspec(self.w3t), wspec(self.b3f),
            ],
            out_specs=out_spec,
            compiler_params=pltpu.CompilerParams(
                dimension_semantics=("parallel",),
                vmem_limit_bytes=vmem_limit),
        )(xp, self.w1f, self.p1, self.avg1,
          self.w2t, self.p2, self.avg2, self.w3t, self.b3f)

        if prod:
            # (bs, hidden, S) is already channels-first; just un-flatten spatial.
            return out.reshape(bs, hidden, h4, w4)
        # tiny path: un-fold the batch from the lane axis (negligible data).
        return out.reshape(hidden, bs, h4, w4).transpose(1, 0, 2, 3)

    # --- sparse branch (boxes + points + texts fused) -------------------------
    def _embed_sparse(self, boxes, points, labels, texts, bs):
        coord_list, type_list = [], []
        if boxes is not None:
            nb = boxes.shape[1]
            coord_list.append(boxes.reshape(bs, nb * 2, 2).astype(jnp.float32))
            btypes = jnp.tile(jnp.array([2.0, 3.0], jnp.float32), nb)
            type_list.append(jnp.broadcast_to(btypes, (bs, nb * 2)))
        if points is not None:
            # TODO(synk): reference SAM appends a padding point (label=-1) when
            #   points are given without boxes; depends on the (unprovided)
            #   PointEmbedding definition, omitted here.
            coord_list.append(points.astype(jnp.float32))
            type_list.append(labels.astype(jnp.float32))

        n_coord = sum(a.shape[1] for a in coord_list)
        n_text = texts.shape[1] if texts is not None else 0
        n_tokens = n_coord + n_text
        if n_tokens == 0:
            return jnp.zeros((bs, 0, self.hidden_size), jnp.float32)

        args = []
        if n_coord > 0:
            coords = jnp.concatenate(coord_list, axis=1)          # (bs, nc, 2)
            types = jnp.concatenate(type_list, axis=1)[..., None]  # (bs, nc, 1)
            args += [coords, types, self.pe3, self.emb3]
        if n_text > 0:
            tx = texts.reshape(bs * n_text, -1).astype(jnp.bfloat16)
            args += [tx, self.tw1, self.tb1, self.tw2, self.tb2]

        ih, iw = self.input_hw
        kernel = partial(_sparse_embed_kernel, bs, n_coord, n_text,
                         1.0 / iw, 1.0 / ih)
        return pl.pallas_call(
            kernel,
            out_shape=jax.ShapeDtypeStruct((bs, n_tokens, self.hidden_size),
                                           jnp.float32),
            in_specs=[pl.BlockSpec(memory_space=VMEM)] * len(args),
            out_specs=pl.BlockSpec(memory_space=VMEM),
        )(*args)

    # --- forward ---------------------------------------------------------------
    def __call__(self, masks=None, boxes=None, points=None, labels=None, texts=None):
        """Returns (sparse_embeddings (bs, n, hidden), dense_embeddings (bs, hidden, h, w))."""
        if masks is not None:
            bs = masks.shape[0]
        elif boxes is not None:
            bs = boxes.shape[0]
        elif points is not None:
            bs = points.shape[0]
        elif texts is not None:
            bs = texts.shape[0]
        else:
            bs = 1

        if masks is not None:
            dense = self._embed_mask(masks)
        else:
            dense = jnp.broadcast_to(
                self.no_mask_embed.reshape(1, self.hidden_size, 1, 1).astype(self.dense_dtype),
                (bs, self.hidden_size,
                 self.image_embedding_size, self.image_embedding_size))

        # TODO(synk): ReconstructImageEmbedding branch and prompt_to_keep
        #   zero-padding omitted (definitions not provided / python bookkeeping).
        sparse = self._embed_sparse(boxes, points, labels, texts, bs)
        return sparse, dense


# ----------------------------------------------------------------------------
if __name__ == "__main__":
    key = jax.random.PRNGKey(0)
    k_mask, k_pts, k_box, k_txt = jax.random.split(key, 4)

    hidden = 32
    img_emb_size = 8          # dense grid h = w = 8  -> mask input 32x32
    input_image_size = 128
    text_dim = 24
    bs = 2

    enc = SamPromptEncoderPallas(
        hidden_size=hidden,
        image_embedding_size=img_emb_size,
        mask_input_channels=16,
        input_image_size=input_image_size,
        text_dim=text_dim,
    )

    masks = jax.random.normal(k_mask, (bs, 1, 4 * img_emb_size, 4 * img_emb_size),
                              jnp.float32)
    points = jax.random.uniform(k_pts, (bs, 3, 2), jnp.float32, 0.0,
                                float(input_image_size))
    labels = jnp.array([[1, 0, -1], [1, 1, 0]], jnp.int32)
    boxes = jax.random.uniform(k_box, (bs, 2, 4), jnp.float32, 0.0,
                               float(input_image_size))
    texts = jax.random.normal(k_txt, (bs, 4, text_dim), jnp.float32)

    sparse, dense = enc(masks=masks, boxes=boxes, points=points, labels=labels,
                        texts=texts)
    (sparse, dense) = jax.block_until_ready((sparse, dense))

    assert sparse.shape == (bs, 2 * 2 + 3 + 4, hidden), sparse.shape
    assert dense.shape == (bs, hidden, img_emb_size, img_emb_size), dense.shape
    assert bool(jnp.all(jnp.isfinite(sparse))) and bool(jnp.all(jnp.isfinite(dense)))
    print("KERNEL_OK")
</pallas_src>

<mosaic_0001>
module attributes {stable_mosaic.version = 11 : i64} {
  func.func @_mask_embed_kernel(%arg0: i32, %arg1: memref<16x128xbf16, #tpu.memory_space<vmem>>, %arg2: memref<16x16xbf16, #tpu.memory_space<vmem>>, %arg3: memref<16x3xf32, #tpu.memory_space<vmem>>, %arg4: memref<16x16xf32, #tpu.memory_space<vmem>>, %arg5: memref<16x16xbf16, #tpu.memory_space<vmem>>, %arg6: memref<16x3xf32, #tpu.memory_space<vmem>>, %arg7: memref<16x16xf32, #tpu.memory_space<vmem>>, %arg8: memref<32x16xbf16, #tpu.memory_space<vmem>>, %arg9: memref<32x1xf32, #tpu.memory_space<vmem>>, %arg10: memref<1x32x128xf32, #tpu.memory_space<vmem>>) attributes {dimension_semantics = [#tpu.dimension_semantics<parallel>], iteration_bounds = array<i64: 1>, scalar_prefetch = 0 : i64, scratch_operands = 0 : i64, tpu.core_type = #tpu.core_type<tc>, window_params = [{transform_indices = @transform_0, window_bounds = array<i64: 16, 128>}, {pipeline_mode = #tpu.pipeline_mode<synchronous>, transform_indices = @transform_1, window_bounds = array<i64: 16, 16>}, {pipeline_mode = #tpu.pipeline_mode<synchronous>, transform_indices = @transform_2, window_bounds = array<i64: 16, 3>}, {pipeline_mode = #tpu.pipeline_mode<synchronous>, transform_indices = @transform_3, window_bounds = array<i64: 16, 16>}, {pipeline_mode = #tpu.pipeline_mode<synchronous>, transform_indices = @transform_4, window_bounds = array<i64: 16, 16>}, {pipeline_mode = #tpu.pipeline_mode<synchronous>, transform_indices = @transform_5, window_bounds = array<i64: 16, 3>}, {pipeline_mode = #tpu.pipeline_mode<synchronous>, transform_indices = @transform_6, window_bounds = array<i64: 16, 16>}, {pipeline_mode = #tpu.pipeline_mode<synchronous>, transform_indices = @transform_7, window_bounds = array<i64: 32, 16>}, {pipeline_mode = #tpu.pipeline_mode<synchronous>, transform_indices = @transform_8, window_bounds = array<i64: 32, 1>}, {transform_indices = @transform_9, window_bounds = array<i64: 1, 32, 128>}]} {
    %c0 = arith.constant 0 : index
    %c0_0 = arith.constant 0 : index
    %0 = vector.load %arg1[%c0, %c0_0] : memref<16x128xbf16, #tpu.memory_space<vmem>>, vector<16x128xbf16>
    %c0_1 = arith.constant 0 : index
    %c0_2 = arith.constant 0 : index
    %1 = vector.load %arg2[%c0_1, %c0_2] : memref<16x16xbf16, #tpu.memory_space<vmem>>, vector<16x16xbf16>
    %cst = arith.constant dense<0.000000e+00> : vector<16x128xf32>
    %2 = tpu.matmul %1, %0, %cst {dimension_numbers = #tpu.dot_dimension_numbers<[1], [0], [0], [1], [0, 0, 1, 1], [], []>} : vector<16x16xbf16>, vector<16x128xbf16>, vector<16x128xf32> -> vector<16x128xf32>
    %c0_3 = arith.constant 0 : index
    %c0_4 = arith.constant 0 : index
    %3 = vector.load %arg3[%c0_3, %c0_4] : memref<16x3xf32, #tpu.memory_space<vmem>>, vector<16x1xf32>
    %4 = vector.broadcast %3 : vector<16x1xf32> to vector<16x128xf32>
    %5 = arith.addf %2, %4 : vector<16x128xf32>
    %c0_5 = arith.constant 0 : index
    %c0_6 = arith.constant 0 : index
    %6 = vector.load %arg4[%c0_5, %c0_6] : memref<16x16xf32, #tpu.memory_space<vmem>>, vector<16x16xf32>
    %c0_7 = arith.constant 0 : index
    %c1 = arith.constant 1 : index
    %7 = vector.load %arg3[%c0_7, %c1] : memref<16x3xf32, #tpu.memory_space<vmem>>, vector<16x1xf32>
    %c0_8 = arith.constant 0 : index
    %c2 = arith.constant 2 : index
    %8 = vector.load %arg3[%c0_8, %c2] : memref<16x3xf32, #tpu.memory_space<vmem>>, vector<16x1xf32>
    %cst_9 = arith.constant dense<0.000000e+00> : vector<16x128xf32>
    %9 = tpu.matmul %6, %5, %cst_9 {dimension_numbers = #tpu.dot_dimension_numbers<[1], [0], [0], [1], [0, 0, 1, 1], [], []>} : vector<16x16xf32>, vector<16x128xf32>, vector<16x128xf32> -> vector<16x128xf32>
    %10 = arith.subf %5, %9 : vector<16x128xf32>
    %11 = arith.mulf %10, %10 : vector<16x128xf32>
    %cst_10 = arith.constant dense<0.000000e+00> : vector<16x128xf32>
    %12 = tpu.matmul %6, %11, %cst_10 {dimension_numbers = #tpu.dot_dimension_numbers<[1], [0], [0], [1], [0, 0, 1, 1], [], []>} : vector<16x16xf32>, vector<16x128xf32>, vector<16x128xf32> -> vector<16x128xf32>
    %cst_11 = arith.constant 9.99999997E-7 : f32
    %13 = vector.broadcast %cst_11 : f32 to vector<16x128xf32>
    %14 = arith.addf %12, %13 : vector<16x128xf32>
    %15 = math.rsqrt %14 : vector<16x128xf32>
    %16 = arith.mulf %10, %15 : vector<16x128xf32>
    %17 = vector.broadcast %7 : vector<16x1xf32> to vector<16x128xf32>
    %18 = arith.mulf %16, %17 : vector<16x128xf32>
    %19 = vector.broadcast %8 : vector<16x1xf32> to vector<16x128xf32>
    %20 = arith.addf %18, %19 : vector<16x128xf32>
    %cst_12 = arith.constant 5.000000e-01 : f32
    %21 = vector.broadcast %cst_12 : f32 to vector<16x128xf32>
    %22 = arith.mulf %21, %20 : vector<16x128xf32>
    %cst_13 = arith.constant 0.707106769 : f32
    %23 = vector.broadcast %cst_13 : f32 to vector<16x128xf32>
    %24 = arith.mulf %20, %23 : vector<16x128xf32>
    %cst_14 = arith.constant 0.000000e+00 : f32
    %25 = vector.broadcast %cst_14 : f32 to vector<16x128xf32>
    %26 = arith.cmpf olt, %24, %25 : vector<16x128xf32>
    %cst_15 = arith.constant -1.000000e+00 : f32
    %cst_16 = arith.constant 1.000000e+00 : f32
    %27 = vector.broadcast %cst_15 : f32 to vector<16x128xf32>
    %28 = vector.broadcast %cst_16 : f32 to vector<16x128xf32>
    %29 = arith.select %26, %27, %28 : vector<16x128xi1>, vector<16x128xf32>
    %30 = math.absf %24 : vector<16x128xf32>
    %cst_17 = arith.constant 0.327591091 : f32
    %31 = vector.broadcast %cst_17 : f32 to vector<16x128xf32>
    %32 = arith.mulf %31, %30 : vector<16x128xf32>
    %cst_18 = arith.constant 1.000000e+00 : f32
    %33 = vector.broadcast %cst_18 : f32 to vector<16x128xf32>
    %34 = arith.addf %33, %32 : vector<16x128xf32>
    %cst_19 = arith.constant 1.000000e+00 : f32
    %35 = vector.broadcast %cst_19 : f32 to vector<16x128xf32>
    %36 = arith.divf %35, %34 : vector<16x128xf32>
    %cst_20 = arith.constant 1.06140542 : f32
    %37 = vector.broadcast %cst_20 : f32 to vector<16x128xf32>
    %38 = arith.mulf %36, %37 : vector<16x128xf32>
    %cst_21 = arith.constant -1.45315206 : f32
    %39 = vector.broadcast %cst_21 : f32 to vector<16x128xf32>
    %40 = arith.addf %39, %38 : vector<16x128xf32>
    %41 = arith.mulf %36, %40 : vector<16x128xf32>
    %cst_22 = arith.constant 1.42141378 : f32
    %42 = vector.broadcast %cst_22 : f32 to vector<16x128xf32>
    %43 = arith.addf %42, %41 : vector<16x128xf32>
    %44 = arith.mulf %36, %43 : vector<16x128xf32>
    %cst_23 = arith.constant -0.284496725 : f32
    %45 = vector.broadcast %cst_23 : f32 to vector<16x128xf32>
    %46 = arith.addf %45, %44 : vector<16x128xf32>
    %47 = arith.mulf %36, %46 : vector<16x128xf32>
    %cst_24 = arith.constant 0.254829586 : f32
    %48 = vector.broadcast %cst_24 : f32 to vector<16x128xf32>
    %49 = arith.addf %48, %47 : vector<16x128xf32>
    %50 = arith.mulf %36, %49 : vector<16x128xf32>
    %cst_25 = arith.constant 0.000000e+00 : f32
    %51 = vector.broadcast %cst_25 : f32 to vector<16x128xf32>
    %52 = arith.subf %51, %30 : vector<16x128xf32>
    %53 = arith.mulf %52, %30 : vector<16x128xf32>
    %54 = math.exp %53 : vector<16x128xf32>
    %55 = arith.mulf %50, %54 : vector<16x128xf32>
    %cst_26 = arith.constant 1.000000e+00 : f32
    %56 = vector.broadcast %cst_26 : f32 to vector<16x128xf32>
    %57 = arith.subf %56, %55 : vector<16x128xf32>
    %58 = arith.mulf %29, %57 : vector<16x128xf32>
    %cst_27 = arith.constant 1.000000e+00 : f32
    %59 = vector.broadcast %cst_27 : f32 to vector<16x128xf32>
    %60 = arith.addf %59, %58 : vector<16x128xf32>
    %61 = arith.mulf %22, %60 : vector<16x128xf32>
    %c0_28 = arith.constant 0 : index
    %c0_29 = arith.constant 0 : index
    %62 = vector.load %arg5[%c0_28, %c0_29] : memref<16x16xbf16, #tpu.memory_space<vmem>>, vector<16x16xbf16>
    %63 = arith.truncf %61 : vector<16x128xf32> to vector<16x128xbf16>
    %cst_30 = arith.constant dense<0.000000e+00> : vector<16x128xf32>
    %64 = tpu.matmul %62, %63, %cst_30 {dimension_numbers = #tpu.dot_dimension_numbers<[1], [0], [0], [1], [0, 0, 1, 1], [], []>} : vector<16x16xbf16>, vector<16x128xbf16>, vector<16x128xf32> -> vector<16x128xf32>
    %c0_31 = arith.constant 0 : index
    %c0_32 = arith.constant 0 : index
    %65 = vector.load %arg6[%c0_31, %c0_32] : memref<16x3xf32, #tpu.memory_space<vmem>>, vector<16x1xf32>
    %66 = vector.broadcast %65 : vector<16x1xf32> to vector<16x128xf32>
    %67 = arith.addf %64, %66 : vector<16x128xf32>
    %c0_33 = arith.constant 0 : index
    %c0_34 = arith.constant 0 : index
    %68 = vector.load %arg7[%c0_33, %c0_34] : memref<16x16xf32, #tpu.memory_space<vmem>>, vector<16x16xf32>
    %c0_35 = arith.constant 0 : index
    %c1_36 = arith.constant 1 : index
    %69 = vector.load %arg6[%c0_35, %c1_36] : memref<16x3xf32, #tpu.memory_space<vmem>>, vector<16x1xf32>
    %c0_37 = arith.constant 0 : index
    %c2_38 = arith.constant 2 : index
    %70 = vector.load %arg6[%c0_37, %c2_38] : memref<16x3xf32, #tpu.memory_space<vmem>>, vector<16x1xf32>
    %cst_39 = arith.constant dense<0.000000e+00> : vector<16x128xf32>
    %71 = tpu.matmul %68, %67, %cst_39 {dimension_numbers = #tpu.dot_dimension_numbers<[1], [0], [0], [1], [0, 0, 1, 1], [], []>} : vector<16x16xf32>, vector<16x128xf32>, vector<16x128xf32> -> vector<16x128xf32>
    %72 = arith.subf %67, %71 : vector<16x128xf32>
    %73 = arith.mulf %72, %72 : vector<16x128xf32>
    %cst_40 = arith.constant dense<0.000000e+00> : vector<16x128xf32>
    %74 = tpu.matmul %68, %73, %cst_40 {dimension_numbers = #tpu.dot_dimension_numbers<[1], [0], [0], [1], [0, 0, 1, 1], [], []>} : vector<16x16xf32>, vector<16x128xf32>, vector<16x128xf32> -> vector<16x128xf32>
    %cst_41 = arith.constant 9.99999997E-7 : f32
    %75 = vector.broadcast %cst_41 : f32 to vector<16x128xf32>
    %76 = arith.addf %74, %75 : vector<16x128xf32>
    %77 = math.rsqrt %76 : vector<16x128xf32>
    %78 = arith.mulf %72, %77 : vector<16x128xf32>
    %79 = vector.broadcast %69 : vector<16x1xf32> to vector<16x128xf32>
    %80 = arith.mulf %78, %79 : vector<16x128xf32>
    %81 = vector.broadcast %70 : vector<16x1xf32> to vector<16x128xf32>
    %82 = arith.addf %80, %81 : vector<16x128xf32>
    %cst_42 = arith.constant 5.000000e-01 : f32
    %83 = vector.broadcast %cst_42 : f32 to vector<16x128xf32>
    %84 = arith.mulf %83, %82 : vector<16x128xf32>
    %cst_43 = arith.constant 0.707106769 : f32
    %85 = vector.broadcast %cst_43 : f32 to vector<16x128xf32>
    %86 = arith.mulf %82, %85 : vector<16x128xf32>
    %cst_44 = arith.constant 0.000000e+00 : f32
    %87 = vector.broadcast %cst_44 : f32 to vector<16x128xf32>
    %88 = arith.cmpf olt, %86, %87 : vector<16x128xf32>
    %cst_45 = arith.constant -1.000000e+00 : f32
    %cst_46 = arith.constant 1.000000e+00 : f32
    %89 = vector.broadcast %cst_45 : f32 to vector<16x128xf32>
    %90 = vector.broadcast %cst_46 : f32 to vector<16x128xf32>
    %91 = arith.select %88, %89, %90 : vector<16x128xi1>, vector<16x128xf32>
    %92 = math.absf %86 : vector<16x128xf32>
    %cst_47 = arith.constant 0.327591091 : f32
    %93 = vector.broadcast %cst_47 : f32 to vector<16x128xf32>
    %94 = arith.mulf %93, %92 : vector<16x128xf32>
    %cst_48 = arith.constant 1.000000e+00 : f32
    %95 = vector.broadcast %cst_48 : f32 to vector<16x128xf32>
    %96 = arith.addf %95, %94 : vector<16x128xf32>
    %cst_49 = arith.constant 1.000000e+00 : f32
    %97 = vector.broadcast %cst_49 : f32 to vector<16x128xf32>
    %98 = arith.divf %97, %96 : vector<16x128xf32>
    %cst_50 = arith.constant 1.06140542 : f32
    %99 = vector.broadcast %cst_50 : f32 to vector<16x128xf32>
    %100 = arith.mulf %98, %99 : vector<16x128xf32>
    %cst_51 = arith.constant -1.45315206 : f32
    %101 = vector.broadcast %cst_51 : f32 to vector<16x128xf32>
    %102 = arith.addf %101, %100 : vector<16x128xf32>
    %103 = arith.mulf %98, %102 : vector<16x128xf32>
    %cst_52 = arith.constant 1.42141378 : f32
    %104 = vector.broadcast %cst_52 : f32 to vector<16x128xf32>
    %105 = arith.addf %104, %103 : vector<16x128xf32>
    %106 = arith.mulf %98, %105 : vector<16x128xf32>
    %cst_53 = arith.constant -0.284496725 : f32
    %107 = vector.broadcast %cst_53 : f32 to vector<16x128xf32>
    %108 = arith.addf %107, %106 : vector<16x128xf32>
    %109 = arith.mulf %98, %108 : vector<16x128xf32>
    %cst_54 = arith.constant 0.254829586 : f32
    %110 = vector.broadcast %cst_54 : f32 to vector<16x128xf32>
    %111 = arith.addf %110, %109 : vector<16x128xf32>
    %112 = arith.mulf %98, %111 : vector<16x128xf32>
    %cst_55 = arith.constant 0.000000e+00 : f32
    %113 = vector.broadcast %cst_55 : f32 to vector<16x128xf32>
    %114 = arith.subf %113, %92 : vector<16x128xf32>
    %115 = arith.mulf %114, %92 : vector<16x128xf32>
    %116 = math.exp %115 : vector<16x128xf32>
    %117 = arith.mulf %112, %116 : vector<16x128xf32>
    %cst_56 = arith.constant 1.000000e+00 : f32
    %118 = vector.broadcast %cst_56 : f32 to vector<16x128xf32>
    %119 = arith.subf %118, %117 : vector<16x128xf32>
    %120 = arith.mulf %91, %119 : vector<16x128xf32>
    %cst_57 = arith.constant 1.000000e+00 : f32
    %121 = vector.broadcast %cst_57 : f32 to vector<16x128xf32>
    %122 = arith.addf %121, %120 : vector<16x128xf32>
    %123 = arith.mulf %84, %122 : vector<16x128xf32>
    %c0_58 = arith.constant 0 : index
    %c0_59 = arith.constant 0 : index
    %124 = vector.load %arg8[%c0_58, %c0_59] : memref<32x16xbf16, #tpu.memory_space<vmem>>, vector<32x16xbf16>
    %125 = arith.truncf %123 : vector<16x128xf32> to vector<16x128xbf16>
    %cst_60 = arith.constant dense<0.000000e+00> : vector<32x128xf32>
    %126 = tpu.matmul %124, %125, %cst_60 {dimension_numbers = #tpu.dot_dimension_numbers<[1], [0], [0], [1], [0, 0, 1, 1], [], []>} : vector<32x16xbf16>, vector<16x128xbf16>, vector<32x128xf32> -> vector<32x128xf32>
    %c0_61 = arith.constant 0 : index
    %c0_62 = arith.constant 0 : index
    %127 = vector.load %arg9[%c0_61, %c0_62] : memref<32x1xf32, #tpu.memory_space<vmem>>, vector<32x1xf32>
    %128 = vector.broadcast %127 : vector<32x1xf32> to vector<32x128xf32>
    %129 = arith.addf %126, %128 : vector<32x128xf32>
    %c0_63 = arith.constant 0 : index
    %c0_64 = arith.constant 0 : index
    %c0_65 = arith.constant 0 : index
    %130 = vector.load %arg10[%c0_63, %c0_64, %c0_65] : memref<1x32x128xf32, #tpu.memory_space<vmem>>, vector<1x32x128xf32>
    %131 = vector.shape_cast %130 : vector<1x32x128xf32> to vector<32x128xf32>
    %132 = vector.shape_cast %129 : vector<32x128xf32> to vector<1x32x128xf32>
    tpu.vector_store %arg10[%c0_63, %c0_64, %c0_65], %132 {strides = array<i32>} : memref<1x32x128xf32, #tpu.memory_space<vmem>>, vector<1x32x128xf32>,
    return
  }
  func.func @transform_0(%arg0: i32) -> (i32, i32) {
    %c0_i32 = arith.constant 0 : i32
    %c0_i32_0 = arith.constant 0 : i32
    return %c0_i32, %arg0 : i32, i32
  }
  func.func @transform_1(%arg0: i32) -> (i32, i32) {
    %c0_i32 = arith.constant 0 : i32
    %c0_i32_0 = arith.constant 0 : i32
    %c0_i32_1 = arith.constant 0 : i32
    return %c0_i32, %c0_i32_0 : i32, i32
  }
  func.func @transform_2(%arg0: i32) -> (i32, i32) {
    %c0_i32 = arith.constant 0 : i32
    %c0_i32_0 = arith.constant 0 : i32
    %c0_i32_1 = arith.constant 0 : i32
    return %c0_i32, %c0_i32_0 : i32, i32
  }
  func.func @transform_3(%arg0: i32) -> (i32, i32) {
    %c0_i32 = arith.constant 0 : i32
    %c0_i32_0 = arith.constant 0 : i32
    %c0_i32_1 = arith.constant 0 : i32
    return %c0_i32, %c0_i32_0 : i32, i32
  }
  func.func @transform_4(%arg0: i32) -> (i32, i32) {
    %c0_i32 = arith.constant 0 : i32
    %c0_i32_0 = arith.constant 0 : i32
    %c0_i32_1 = arith.constant 0 : i32
    return %c0_i32, %c0_i32_0 : i32, i32
  }
  func.func @transform_5(%arg0: i32) -> (i32, i32) {
    %c0_i32 = arith.constant 0 : i32
    %c0_i32_0 = arith.constant 0 : i32
    %c0_i32_1 = arith.constant 0 : i32
    return %c0_i32, %c0_i32_0 : i32, i32
  }
  func.func @transform_6(%arg0: i32) -> (i32, i32) {
    %c0_i32 = arith.constant 0 : i32
    %c0_i32_0 = arith.constant 0 : i32
    %c0_i32_1 = arith.constant 0 : i32
    return %c0_i32, %c0_i32_0 : i32, i32
  }
  func.func @transform_7(%arg0: i32) -> (i32, i32) {
    %c0_i32 = arith.constant 0 : i32
    %c0_i32_0 = arith.constant 0 : i32
    %c0_i32_1 = arith.constant 0 : i32
    return %c0_i32, %c0_i32_0 : i32, i32
  }
  func.func @transform_8(%arg0: i32) -> (i32, i32) {
    %c0_i32 = arith.constant 0 : i32
    %c0_i32_0 = arith.constant 0 : i32
    %c0_i32_1 = arith.constant 0 : i32
    return %c0_i32, %c0_i32_0 : i32, i32
  }
  func.func @transform_9(%arg0: i32) -> (i32, i32, i32) {
    %c0_i32 = arith.constant 0 : i32
    %c0_i32_0 = arith.constant 0 : i32
    %c0_i32_1 = arith.constant 0 : i32
    return %c0_i32, %c0_i32_0, %arg0 : i32, i32, i32
  }
}

</mosaic_0001>

<llo_original>
// kernel: tpu_custom_call.1
$region0: #{tpu_custom_call.1}
  #allocation0 [shape = 'u32[]', space=smem, size = 0x4, offset = 0x4, fixed_abs, tag = 'smem constant byte address 0x4 - core index']
  #allocation1 [shape = 'u32[72,128]{1,0:T(1,128)}', space=vmem, size = 0x9000, scoped, tag = 'internal scratch']
  %s0 = inlined_call_operand.vmem [shape: bf16[16,128], index: 0, kind: input, shape index: {}]
  %s1 = inlined_call_operand.vmem [shape: bf16[16,16], index: 1, kind: input, shape index: {}]
  %s2 = inlined_call_operand.vmem [shape: f32[16,3], index: 2, kind: input, shape index: {}]
  %s3 = inlined_call_operand.vmem [shape: f32[16,16], index: 3, kind: input, shape index: {}]
  %s4 = inlined_call_operand.vmem [shape: bf16[16,16], index: 4, kind: input, shape index: {}]
  %s5 = inlined_call_operand.vmem [shape: f32[16,3], index: 5, kind: input, shape index: {}]
  %s6 = inlined_call_operand.vmem [shape: f32[16,16], index: 6, kind: input, shape index: {}]
  %s7 = inlined_call_operand.vmem [shape: bf16[32,16], index: 7, kind: input, shape index: {}]
  %s8 = inlined_call_operand.vmem [shape: f32[32,1], index: 8, kind: input, shape index: {}]
  %s9 = inlined_call_operand.hbm [shape: f32[1,32,128], index: 9, kind: output, shape index: {}]
  %s10 = sld [smem:[#allocation0]]
  $region46: #{tpu_custom_call.1} parent=0
    _
  %s12 = ssub.s32 1, %s10
  %s13 = scalar_select 0, %s12, %s10
  $region1: #{tpu_custom_call.1} parent=0
    #allocation2 [shape = 'u8[16384]{0}', space=vmem, size = 0x4000, scoped, tag = 'output window, operand 0, single buffered']
    #allocation3 [shape = 's32[1]{0}', space=sflag, size = 0x4, scoped, tag = 'scoped memory for tpu_custom_call.1']
    %14 = vsyncpa [#allocation3], 0
    // Predicated region
    $region2: #{tpu_custom_call.1} parent=1 // pred_check
      _
    $region3: #{tpu_custom_call.1} parent=1 // pred_check_branch
      %16 = sbr.rel (0) target = $region5
    $region4: #{tpu_custom_call.1} parent=1 // pred_region
      _
    $region5: #{tpu_custom_call.1} parent=1 // pred_fallthru
      _
    // Predicated region
    $region6: #{tpu_custom_call.1} parent=1 // pred_check
      _
    $region7: #{tpu_custom_call.1} parent=1 // pred_check_branch
      %18 = sbr.rel (0) target = $region9
    $region8: #{tpu_custom_call.1} parent=1 // pred_region
      _
    $region9: #{tpu_custom_call.1} parent=1 // pred_fallthru
      _
    // Predicated region
    $region10: #{tpu_custom_call.1} parent=1 // pred_check
      _
    $region11: #{tpu_custom_call.1} parent=1 // pred_check_branch
      %20 = sbr.rel (0) target = $region13
    $region12: #{tpu_custom_call.1} parent=1 // pred_region
      _
    $region13: #{tpu_custom_call.1} parent=1 // pred_fallthru
      _
    // Predicated region
    $region14: #{tpu_custom_call.1} parent=1 // pred_check
      _
    $region15: #{tpu_custom_call.1} parent=1 // pred_check_branch
      %22 = sbr.rel (0) target = $region17
    $region16: #{tpu_custom_call.1} parent=1 // pred_region
      _
    $region17: #{tpu_custom_call.1} parent=1 // pred_fallthru
      _
    // Predicated region
    $region18: #{tpu_custom_call.1} parent=1 // pred_check
      _
    $region19: #{tpu_custom_call.1} parent=1 // pred_check_branch
      %24 = sbr.rel (0) target = $region21
    $region20: #{tpu_custom_call.1} parent=1 // pred_region
      _
    $region21: #{tpu_custom_call.1} parent=1 // pred_fallthru
      _
    // Predicated region
    $region22: #{tpu_custom_call.1} parent=1 // pred_check
      _
    $region23: #{tpu_custom_call.1} parent=1 // pred_check_branch
      %26 = sbr.rel (0) target = $region25
    $region24: #{tpu_custom_call.1} parent=1 // pred_region
      _
    $region25: #{tpu_custom_call.1} parent=1 // pred_fallthru
      _
    // Predicated region
    $region26: #{tpu_custom_call.1} parent=1 // pred_check
      _
    $region27: #{tpu_custom_call.1} parent=1 // pred_check_branch
      %28 = sbr.rel (0) target = $region29
    $region28: #{tpu_custom_call.1} parent=1 // pred_region
      _
    $region29: #{tpu_custom_call.1} parent=1 // pred_fallthru
      _
    // Predicated region
    $region30: #{tpu_custom_call.1} parent=1 // pred_check
      _
    $region31: #{tpu_custom_call.1} parent=1 // pred_check_branch
      %30 = sbr.rel (0) target = $region33
    $region32: #{tpu_custom_call.1} parent=1 // pred_region
      _
    $region33: #{tpu_custom_call.1} parent=1 // pred_fallthru
      _
    // Predicated region
    $region34: #{tpu_custom_call.1} parent=1 // pred_check
      _
    $region35: #{tpu_custom_call.1} parent=1 // pred_check_branch
      %32 = sbr.rel (0) target = $region37
    $region36: #{tpu_custom_call.1} parent=1 // pred_region
      _
    $region37: #{tpu_custom_call.1} parent=1 // pred_fallthru
      _
    %v34 = vld [vmem:[%s0] sm:$0xf]
    %v35 = vld [vmem:[%s0 + $0x4] sm:$0xf]
    %v36 = vld [vmem:[%s1] sm:$0xf]
    %v37 = vld [vmem:[%s1 + $0x4] sm:$0xf]
    %v38 = vld [vmem:[%s2] sm:$0xff]
    %v39 = vld [vmem:[%s2 + $0x8] sm:$0xff]
    %41 = vset.pattern.permute.xlu0 0
    %42 = vperm.xlu0 %41, %v38
    %v43 = vpop.permute.xlu0 %42
    %46 = vset.pattern.permute.xlu0 0
    %47 = vperm.xlu0 %46, %v39
    %v48 = vpop.permute.xlu0 %47
    %v52 = vunpack.c.l.b16 %v36
    %v53 = vunpack.c.l.b16 %v37
    %v54 = vpack.c.b16 %v53, %v52
    %v57 = vunpack.c.l.b16 %v34
    %v58 = vunpack.c.l.b16 %v35
    %v59 = vpack.c.b16 %v58, %v57
    %vm61 = vcmask 130048
    %v63 = vsel %vm61, %v54, 0
    %65 = vmatpush.bf16.msra.mxu0 0
    %66 = vmatpush.bf16.msra.mxu0 0
    %67 = vmatpush.bf16.msra.mxu0 0
    %68 = vmatpush.bf16.msra.mxu0 0
    %69 = vmatpush.bf16.msra.mxu0 0
    %70 = vmatpush.bf16.msra.mxu0 0
    %71 = vmatpush.bf16.msra.mxu0 0
    %72 = vmatpush.bf16.msra.mxu0 %v59
    %73 = vmatmul.bf16.gmra.mxu0 %v63
    %v74 = vpop.f32.mrf.mxu0
    %v75 = vadd.f32 %v43, %v74
    %v76 = vpop.f32.mrf.mxu0
    %v77 = vadd.f32 %v48, %v76
    %78 = vdwg.mxu0
    %v79 = vld [vmem:[%s3] sm:$0xff]
    %v80 = vld [vmem:[%s3 + $0x8] sm:$0xff]
    %v82 = vsel %vm61, %v79, 0
    %v85 = vsel %vm61, %v80, 0
    %87 = vmatpush.msra.mxu0 0.0
    %88 = vmatpush.msra.mxu0 0.0
    %89 = vmatpush.msra.mxu0 0.0
    %90 = vmatpush.msra.mxu0 0.0
    %91 = vmatpush.msra.mxu0 0.0
    %92 = vmatpush.msra.mxu0 0.0
    %93 = vmatpush.msra.mxu0 0.0
    %94 = vmatpush.msra.mxu0 0.0
    %95 = vmatpush.msra.mxu0 0.0
    %96 = vmatpush.msra.mxu0 0.0
    %97 = vmatpush.msra.mxu0 0.0
    %98 = vmatpush.msra.mxu0 0.0
    %99 = vmatpush.msra.mxu0 0.0
    %100 = vmatpush.msra.mxu0 0.0
    %101 = vmatpush.msra.mxu0 %v77
    %102 = vmatpush.msra.mxu0 %v75
    %103 = vmatmul.f32.gmra.mxu0 %v82
    %v104 = vpop.f32.mrf.mxu0
    %v105 = vadd.f32 0.0, %v104
    %106 = vmatmul.f32.gmra.mxu0 %v85
    %v107 = vpop.f32.mrf.mxu0
    %v108 = vadd.f32 0.0, %v107
    %109 = vdwg.mxu0
    %v110 = vsub.f32 %v75, %v105
    %v111 = vsub.f32 %v77, %v108
    %v112 = vmul.f32 %v110, %v110
    %v113 = vmul.f32 %v111, %v111
    %114 = vmatpush.msra.mxu0 0.0
    %115 = vmatpush.msra.mxu0 0.0
    %116 = vmatpush.msra.mxu0 0.0
    %117 = vmatpush.msra.mxu0 0.0
    %118 = vmatpush.msra.mxu0 0.0
    %119 = vmatpush.msra.mxu0 0.0
    %120 = vmatpush.msra.mxu0 0.0
    %121 = vmatpush.msra.mxu0 0.0
    %122 = vmatpush.msra.mxu0 0.0
    %123 = vmatpush.msra.mxu0 0.0
    %124 = vmatpush.msra.mxu0 0.0
    %125 = vmatpush.msra.mxu0 0.0
    %126 = vmatpush.msra.mxu0 0.0
    %127 = vmatpush.msra.mxu0 0.0
    %128 = vmatpush.msra.mxu0 %v113
    %129 = vmatpush.msra.mxu0 %v112
    %130 = vmatmul.f32.gmra.mxu0 %v82
    %v131 = vpop.f32.mrf.mxu0
    %v132 = vadd.f32 1e-06, %v131
    %133 = vmatmul.f32.gmra.mxu0 %v85
    %v134 = vpop.f32.mrf.mxu0
    %v135 = vadd.f32 1e-06, %v134
    %136 = vdwg.mxu0
    %v137 = vrsqrt.pop %v132
    %v138 = vmul.f32 %v137, %v132
    %v139 = vmul.f32 %v138, %v137
    %v140 = vmul.f32 0.5, %v139
    %v141 = vsub.f32 1.5, %v140
    %v142 = vmul.f32 %v137, %v141
    %vm143 = vweird.f32 %v132
    %vm144 = vweird.f32 %v137
    %vm145 = vmor %vm143, %vm144
    %v146 = vsel %vm145, %v137, %v142
    %v147 = vrsqrt.pop %v135
    %v148 = vmul.f32 %v147, %v135
    %v149 = vmul.f32 %v148, %v147
    %v150 = vmul.f32 0.5, %v149
    %v151 = vsub.f32 1.5, %v150
    %v152 = vmul.f32 %v147, %v151
    %vm153 = vweird.f32 %v135
    %vm154 = vweird.f32 %v147
    %vm155 = vmor %vm153, %vm154
    %v156 = vsel %vm155, %v147, %v152
    %v157 = vmul.f32 %v110, %v146
    %v158 = vmul.f32 %v111, %v156
    %159 = vset.pattern.permute.xlu0 1
    %160 = vperm.xlu0 %159, %v38
    %v161 = vpop.permute.xlu0 %160
    %163 = vset.pattern.permute.xlu0 1
    %164 = vperm.xlu0 %163, %v39
    %v165 = vpop.permute.xlu0 %164
    %v167 = vmul.f32 %v157, %v161
    %v168 = vmul.f32 %v158, %v165
    %169 = vset.pattern.permute.xlu0 2
    %170 = vperm.xlu0 %169, %v38
    %v171 = vpop.permute.xlu0 %170
    %173 = vset.pattern.permute.xlu0 2
    %174 = vperm.xlu0 %173, %v39
    %v175 = vpop.permute.xlu0 %174
    %v177 = vadd.f32 %v167, %v171
    %v178 = vadd.f32 %v168, %v175
    %v179 = vmul.f32 %v177, 0.5
    %v180 = vmul.f32 %v178, 0.5
    %v181 = vmul.f32 %v177, 0.70710677
    %v182 = vmul.f32 %v178, 0.70710677
    %vm183 = vcmp.lt.f32.partialorder %v181, 0.0
    %vm184 = vcmp.lt.f32.partialorder %v182, 0.0
    %v185 = vsel %vm183, -1.0, 1.0
    %v186 = vsel %vm184, -1.0, 1.0
    %v187 = vand.u32 2147483647, %v181
    %v188 = vand.u32 2147483647, %v182
    %v189 = vmul.f32 %v187, 0.3275911
    %v190 = vmul.f32 %v188, 0.3275911
    %v191 = vadd.f32 %v189, 1.0
    %v192 = vadd.f32 %v190, 1.0
    %v193 = vrcp.pop %v191
    %v194 = vmul.f32 %v191, %v193
    %v195 = vsub.f32 1.0, %v194
    %v196 = vmul.f32 %v193, %v195
    %v197 = vadd.f32 %v193, %v196
    %vm198 = vweird.f32 %v191
    %vm199 = vweird.f32 %v193
    %vm200 = vmor %vm198, %vm199
    %v201 = vsel %vm200, %v193, %v197
    %v202 = vand.u32 2147483647, %v191
    %vm203 = vcmp.eq.f32.partialorder %v202, 8.507059e+37
    %v204 = vand.u32 %v191, 2147483648
    %v205 = vor.u32 1.1754944e-38, %v204
    %v206 = vsel %vm203, %v205, %v201
    %v207 = vmul.f32 1.0, %v206
    %v208 = vrcp.pop %v192
    %v209 = vmul.f32 %v192, %v208
    %v210 = vsub.f32 1.0, %v209
    %v211 = vmul.f32 %v208, %v210
    %v212 = vadd.f32 %v208, %v211
    %vm213 = vweird.f32 %v192
    %vm214 = vweird.f32 %v208
    %vm215 = vmor %vm213, %vm214
    %v216 = vsel %vm215, %v208, %v212
    %v217 = vand.u32 2147483647, %v192
    %vm218 = vcmp.eq.f32.partialorder %v217, 8.507059e+37
    %v219 = vand.u32 %v192, 2147483648
    %v220 = vor.u32 1.1754944e-38, %v219
    %v221 = vsel %vm218, %v220, %v216
    %v222 = vmul.f32 1.0, %v221
    %v223 = vmul.f32 %v207, 1.0614054
    %v224 = vmul.f32 %v222, 1.0614054
    %v225 = vadd.f32 %v223, -1.4531521
    %v226 = vadd.f32 %v224, -1.4531521
    %v227 = vmul.f32 %v207, %v225
    %v228 = vmul.f32 %v222, %v226
    %v229 = vadd.f32 %v227, 1.4214138
    %v230 = vadd.f32 %v228, 1.4214138
    %v231 = vmul.f32 %v207, %v229
    %v232 = vmul.f32 %v222, %v230
    %v233 = vadd.f32 %v231, -0.28449672
    %v234 = vadd.f32 %v232, -0.28449672
    %v235 = vmul.f32 %v207, %v233
    %v236 = vmul.f32 %v222, %v234
    %v237 = vadd.f32 %v235, 0.2548296
    %v238 = vadd.f32 %v236, 0.2548296
    %v239 = vmul.f32 %v207, %v237
    %v240 = vmul.f32 %v222, %v238
    %v241 = vsub.f32 0.0, %v187
    %v242 = vsub.f32 0.0, %v188
    %v243 = vmul.f32 %v241, %v187
    %v244 = vmul.f32 %v242, %v188
    %v245 = vmul.f32 %v243, 1.442695
    %v246 = vpow.pop %v245
    %v247 = vmul.f32 %v244, 1.442695
    %v248 = vpow.pop %v247
    %v249 = vmul.f32 %v239, %v246
    %v250 = vmul.f32 %v240, %v248
    %v251 = vsub.f32 1.0, %v249
    %v252 = vsub.f32 1.0, %v250
    %v253 = vmul.f32 %v185, %v251
    %v254 = vmul.f32 %v186, %v252
    %v255 = vadd.f32 %v253, 1.0
    %v256 = vadd.f32 %v254, 1.0
    %v257 = vmul.f32 %v179, %v255
    %v258 = vmul.f32 %v180, %v256
    %v259 = vld [vmem:[%s4] sm:$0xf]
    %v260 = vld [vmem:[%s4 + $0x4] sm:$0xf]
    %v261 = vpack.c.bf16 %v258, %v257
    %v262 = vld [vmem:[%s5] sm:$0xff]
    %v263 = vld [vmem:[%s5 + $0x8] sm:$0xff]
    %265 = vset.pattern.permute.xlu0 0
    %266 = vperm.xlu0 %265, %v262
    %v267 = vpop.permute.xlu0 %266
    %270 = vset.pattern.permute.xlu0 0
    %271 = vperm.xlu0 %270, %v263
    %v272 = vpop.permute.xlu0 %271
    %v276 = vunpack.c.l.b16 %v259
    %v277 = vunpack.c.l.b16 %v260
    %v278 = vpack.c.b16 %v277, %v276
    %v280 = vsel %vm61, %v278, 0
    %282 = vmatpush.bf16.msra.mxu0 0
    %283 = vmatpush.bf16.msra.mxu0 0
    %284 = vmatpush.bf16.msra.mxu0 0
    %285 = vmatpush.bf16.msra.mxu0 0
    %286 = vmatpush.bf16.msra.mxu0 0
    %287 = vmatpush.bf16.msra.mxu0 0
    %288 = vmatpush.bf16.msra.mxu0 0
    %289 = vmatpush.bf16.msra.mxu0 %v261
    %290 = vmatmul.bf16.gmra.mxu0 %v280
    %v291 = vpop.f32.mrf.mxu0
    %v292 = vadd.f32 %v267, %v291
    %v293 = vpop.f32.mrf.mxu0
    %v294 = vadd.f32 %v272, %v293
    %295 = vdwg.mxu0
    %v296 = vld [vmem:[%s6] sm:$0xff]
    %v297 = vld [vmem:[%s6 + $0x8] sm:$0xff]
    %v299 = vsel %vm61, %v296, 0
    %v302 = vsel %vm61, %v297, 0
    %304 = vmatpush.msra.mxu0 0.0
    %305 = vmatpush.msra.mxu0 0.0
    %306 = vmatpush.msra.mxu0 0.0
    %307 = vmatpush.msra.mxu0 0.0
    %308 = vmatpush.msra.mxu0 0.0
    %309 = vmatpush.msra.mxu0 0.0
    %310 = vmatpush.msra.mxu0 0.0
    %311 = vmatpush.msra.mxu0 0.0
    %312 = vmatpush.msra.mxu0 0.0
    %313 = vmatpush.msra.mxu0 0.0
    %314 = vmatpush.msra.mxu0 0.0
    %315 = vmatpush.msra.mxu0 0.0
    %316 = vmatpush.msra.mxu0 0.0
    %317 = vmatpush.msra.mxu0 0.0
    %318 = vmatpush.msra.mxu0 %v294
    %319 = vmatpush.msra.mxu0 %v292
    %320 = vmatmul.f32.gmra.mxu0 %v299
    %v321 = vpop.f32.mrf.mxu0
    %v322 = vadd.f32 0.0, %v321
    %323 = vmatmul.f32.gmra.mxu0 %v302
    %v324 = vpop.f32.mrf.mxu0
    %v325 = vadd.f32 0.0, %v324
    %326 = vdwg.mxu0
    %v327 = vsub.f32 %v292, %v322
    %v328 = vsub.f32 %v294, %v325
    %v329 = vmul.f32 %v327, %v327
    %v330 = vmul.f32 %v328, %v328
    %331 = vmatpush.msra.mxu0 0.0
    %332 = vmatpush.msra.mxu0 0.0
    %333 = vmatpush.msra.mxu0 0.0
    %334 = vmatpush.msra.mxu0 0.0
    %335 = vmatpush.msra.mxu0 0.0
    %336 = vmatpush.msra.mxu0 0.0
    %337 = vmatpush.msra.mxu0 0.0
    %338 = vmatpush.msra.mxu0 0.0
    %339 = vmatpush.msra.mxu0 0.0
    %340 = vmatpush.msra.mxu0 0.0
    %341 = vmatpush.msra.mxu0 0.0
    %342 = vmatpush.msra.mxu0 0.0
    %343 = vmatpush.msra.mxu0 0.0
    %344 = vmatpush.msra.mxu0 0.0
    %345 = vmatpush.msra.mxu0 %v330
    %346 = vmatpush.msra.mxu0 %v329
    %347 = vmatmul.f32.gmra.mxu0 %v299
    %v348 = vpop.f32.mrf.mxu0
    %v349 = vadd.f32 1e-06, %v348
    %350 = vmatmul.f32.gmra.mxu0 %v302
    %v351 = vpop.f32.mrf.mxu0
    %v352 = vadd.f32 1e-06, %v351
    %353 = vdwg.mxu0
    %v354 = vrsqrt.pop %v349
    %v355 = vmul.f32 %v354, %v349
    %v356 = vmul.f32 %v355, %v354
    %v357 = vmul.f32 0.5, %v356
    %v358 = vsub.f32 1.5, %v357
    %v359 = vmul.f32 %v354, %v358
    %vm360 = vweird.f32 %v349
    %vm361 = vweird.f32 %v354
    %vm362 = vmor %vm360, %vm361
    %v363 = vsel %vm362, %v354, %v359
    %v364 = vrsqrt.pop %v352
    %v365 = vmul.f32 %v364, %v352
    %v366 = vmul.f32 %v365, %v364
    %v367 = vmul.f32 0.5, %v366
    %v368 = vsub.f32 1.5, %v367
    %v369 = vmul.f32 %v364, %v368
    %vm370 = vweird.f32 %v352
    %vm371 = vweird.f32 %v364
    %vm372 = vmor %vm370, %vm371
    %v373 = vsel %vm372, %v364, %v369
    %v374 = vmul.f32 %v327, %v363
    %v375 = vmul.f32 %v328, %v373
    %376 = vset.pattern.permute.xlu0 1
    %377 = vperm.xlu0 %376, %v262
    %v378 = vpop.permute.xlu0 %377
    %380 = vset.pattern.permute.xlu0 1
    %381 = vperm.xlu0 %380, %v263
    %v382 = vpop.permute.xlu0 %381
    %v384 = vmul.f32 %v374, %v378
    %v385 = vmul.f32 %v375, %v382
    %386 = vset.pattern.permute.xlu0 2
    %387 = vperm.xlu0 %386, %v262
    %v388 = vpop.permute.xlu0 %387
    %390 = vset.pattern.permute.xlu0 2
    %391 = vperm.xlu0 %390, %v263
    %v392 = vpop.permute.xlu0 %391
    %v394 = vadd.f32 %v384, %v388
    %v395 = vadd.f32 %v385, %v392
    %v396 = vmul.f32 %v394, 0.5
    %v397 = vmul.f32 %v395, 0.5
    %v398 = vmul.f32 %v394, 0.70710677
    %v399 = vmul.f32 %v395, 0.70710677
    %vm400 = vcmp.lt.f32.partialorder %v398, 0.0
    %vm401 = vcmp.lt.f32.partialorder %v399, 0.0
    %v402 = vsel %vm400, -1.0, 1.0
    %v403 = vsel %vm401, -1.0, 1.0
    %v404 = vand.u32 2147483647, %v398
    %v405 = vand.u32 2147483647, %v399
    %v406 = vmul.f32 %v404, 0.3275911
    %v407 = vmul.f32 %v405, 0.3275911
    %v408 = vadd.f32 %v406, 1.0
    %v409 = vadd.f32 %v407, 1.0
    %v410 = vrcp.pop %v408
    %v411 = vmul.f32 %v408, %v410
    %v412 = vsub.f32 1.0, %v411
    %v413 = vmul.f32 %v410, %v412
    %v414 = vadd.f32 %v410, %v413
    %vm415 = vweird.f32 %v408
    %vm416 = vweird.f32 %v410
    %vm417 = vmor %vm415, %vm416
    %v418 = vsel %vm417, %v410, %v414
    %v419 = vand.u32 2147483647, %v408
    %vm420 = vcmp.eq.f32.partialorder %v419, 8.507059e+37
    %v421 = vand.u32 %v408, 2147483648
    %v422 = vor.u32 1.1754944e-38, %v421
    %v423 = vsel %vm420, %v422, %v418
    %v424 = vmul.f32 1.0, %v423
    %v425 = vrcp.pop %v409
    %v426 = vmul.f32 %v409, %v425
    %v427 = vsub.f32 1.0, %v426
    %v428 = vmul.f32 %v425, %v427
    %v429 = vadd.f32 %v425, %v428
    %vm430 = vweird.f32 %v409
    %vm431 = vweird.f32 %v425
    %vm432 = vmor %vm430, %vm431
    %v433 = vsel %vm432, %v425, %v429
    %v434 = vand.u32 2147483647, %v409
    %vm435 = vcmp.eq.f32.partialorder %v434, 8.507059e+37
    %v436 = vand.u32 %v409, 2147483648
    %v437 = vor.u32 1.1754944e-38, %v436
    %v438 = vsel %vm435, %v437, %v433
    %v439 = vmul.f32 1.0, %v438
    %v440 = vmul.f32 %v424, 1.0614054
    %v441 = vmul.f32 %v439, 1.0614054
    %v442 = vadd.f32 %v440, -1.4531521
    %v443 = vadd.f32 %v441, -1.4531521
    %v444 = vmul.f32 %v424, %v442
    %v445 = vmul.f32 %v439, %v443
    %v446 = vadd.f32 %v444, 1.4214138
    %v447 = vadd.f32 %v445, 1.4214138
    %v448 = vmul.f32 %v424, %v446
    %v449 = vmul.f32 %v439, %v447
    %v450 = vadd.f32 %v448, -0.28449672
    %v451 = vadd.f32 %v449, -0.28449672
    %v452 = vmul.f32 %v424, %v450
    %v453 = vmul.f32 %v439, %v451
    %v454 = vadd.f32 %v452, 0.2548296
    %v455 = vadd.f32 %v453, 0.2548296
    %v456 = vmul.f32 %v424, %v454
    %v457 = vmul.f32 %v439, %v455
    %v458 = vsub.f32 0.0, %v404
    %v459 = vsub.f32 0.0, %v405
    %v460 = vmul.f32 %v458, %v404
    %v461 = vmul.f32 %v459, %v405
    %v462 = vmul.f32 %v460, 1.442695
    %v463 = vpow.pop %v462
    %v464 = vmul.f32 %v461, 1.442695
    %v465 = vpow.pop %v464
    %v466 = vmul.f32 %v456, %v463
    %v467 = vmul.f32 %v457, %v465
    %v468 = vsub.f32 1.0, %v466
    %v469 = vsub.f32 1.0, %v467
    %v470 = vmul.f32 %v402, %v468
    %v471 = vmul.f32 %v403, %v469
    %v472 = vadd.f32 %v470, 1.0
    %v473 = vadd.f32 %v471, 1.0
    %v474 = vmul.f32 %v396, %v472
    %v475 = vmul.f32 %v397, %v473
    %v476 = vld [vmem:[%s7] sm:$0xf]
    %v477 = vld [vmem:[%s7 + $0x4] sm:$0xf]
    %v478 = vld [vmem:[%s7 + $0x8] sm:$0xf]
    %v479 = vld [vmem:[%s7 + $0xc] sm:$0xf]
    %v480 = vpack.c.bf16 %v475, %v474
    %v481 = vld [vmem:[%s8] sm:$0xff]
    %v482 = vld [vmem:[%s8 + $0x8] sm:$0xff]
    %v483 = vld [vmem:[%s8 + $0x10] sm:$0xff]
    %v484 = vld [vmem:[%s8 + $0x18] sm:$0xff]
    %486 = vset.pattern.permute.xlu0 0
    %487 = vperm.xlu0 %486, %v481
    %v488 = vpop.permute.xlu0 %487
    %491 = vset.pattern.permute.xlu0 0
    %492 = vperm.xlu0 %491, %v482
    %v493 = vpop.permute.xlu0 %492
    %496 = vset.pattern.permute.xlu0 0
    %497 = vperm.xlu0 %496, %v483
    %v498 = vpop.permute.xlu0 %497
    %501 = vset.pattern.permute.xlu0 0
    %502 = vperm.xlu0 %501, %v484
    %v503 = vpop.permute.xlu0 %502
    %v509 = vunpack.c.l.b16 %v476
    %v510 = vunpack.c.l.b16 %v477
    %v511 = vunpack.c.l.b16 %v478
    %v512 = vunpack.c.l.b16 %v479
    %v513 = vpack.c.b16 %v510, %v509
    %v514 = vpack.c.b16 %v512, %v511
    %v516 = vsel %vm61, %v513, 0
    %v519 = vsel %vm61, %v514, 0
    %521 = vmatpush.bf16.msra.mxu0 0
    %522 = vmatpush.bf16.msra.mxu0 0
    %523 = vmatpush.bf16.msra.mxu0 0
    %524 = vmatpush.bf16.msra.mxu0 0
    %525 = vmatpush.bf16.msra.mxu0 0
    %526 = vmatpush.bf16.msra.mxu0 0
    %527 = vmatpush.bf16.msra.mxu0 0
    %528 = vmatpush.bf16.msra.mxu0 %v480
    %529 = vmatmul.bf16.gmra.mxu0 %v516
    %v530 = vpop.f32.mrf.mxu0
    %v531 = vadd.f32 %v488, %v530
    %v532 = vpop.f32.mrf.mxu0
    %v533 = vadd.f32 %v493, %v532
    %534 = vmatmul.bf16.gmra.mxu0 %v519
    %v535 = vpop.f32.mrf.mxu0
    %v536 = vadd.f32 %v498, %v535
    %v537 = vpop.f32.mrf.mxu0
    %v538 = vadd.f32 %v503, %v537
    %539 = vdwg.mxu0
    %540 = vst [vmem:[#allocation2] sm:$0xff] %v531
    %541 = vst [vmem:[#allocation2 + $0x8] sm:$0xff] %v533
    %542 = vst [vmem:[#allocation2 + $0x10] sm:$0xff] %v536
    %543 = vst [vmem:[#allocation2 + $0x18] sm:$0xff] %v538
    // Predicated region
    $region38: #{tpu_custom_call.1} parent=1 // pred_check
      _
    $region39: #{tpu_custom_call.1} parent=1 // pred_check_branch
      %545 = sbr.rel (0) target = $region41
    $region40: #{tpu_custom_call.1} parent=1 // pred_region
      %547 = vsyncadd [#allocation3], 0
      %s548 = sshll.u32 [#allocation2], 4
      %s549 = int_to_ptr.vmem [resolvable:$true] %s548
      %s550 = sshll.u32 %s9, 4
      %s551 = int_to_ptr.hbm [resolvable:$true] %s550
      %556 = dma.vmem_to_hbm [thread:$0]  %s549, 512, %s551, [#allocation3], 128, 128, 8
    $region41: #{tpu_custom_call.1} parent=1 // pred_fallthru
      _
    // Predicated region
    $region42: #{tpu_custom_call.1} parent=1 // pred_check
      _
    $region43: #{tpu_custom_call.1} parent=1 // pred_check_branch
      %558 = sbr.rel (0) target = $region45
    $region44: #{tpu_custom_call.1} parent=1 // pred_region
      %560 = dma.done [#allocation3], 512
    $region45: #{tpu_custom_call.1} parent=1 // pred_fallthru
      _
    %561 = vsyncpa [#allocation3], 1

</llo_original>
